<compile_context>
chip_gen: v5e
topology: v5e:2x2
jax: 0.10.0
libtpu: 0.0.40
codegen_flags: <defaults>
</compile_context>

<pallas_src>
import functools

import jax
import jax.numpy as jnp
from jax.experimental import pallas as pl
from jax.experimental.pallas import tpu as pltpu


def _ddc_conv_kernel(kw_ref, x_ref, out_ref, xpad_ref, *,
                     ksize, pad, in_h, in_w, out_h, out_w):
    """Dynamic depthwise cross-correlation over TBC planes at once.

    kw_ref  : (k*k, TBC)  f32  per-plane kernel taps (lanes = planes)
    x_ref   : (in_h, in_w, TBC)         input planes (lanes = planes)
    out_ref : (out_h, out_w, TBC)       output planes
    xpad_ref: (in_h+2p, in_w+2p, TBC)   VMEM scratch for zero-padded input
    """
    # Build the zero-padded tile in VMEM (re-zero every step: keeps the body
    # self-contained so the "parallel" bc axis is safe on megacore parts).
    xpad_ref[...] = jnp.zeros_like(xpad_ref)
    xpad_ref[pad:pad + in_h, pad:pad + in_w, :] = x_ref[...].astype(jnp.float32)

    kw = kw_ref[...].astype(jnp.float32)                    # (k*k, TBC)
    tbc = out_ref.shape[-1]
    acc = jnp.zeros((out_h, out_w, tbc), jnp.float32)

    # F.conv2d is cross-correlation: out[h,w,bc] += k[i,j,bc] * xpad[h+i, w+j, bc]
    for i in range(ksize):                                  # static unroll: 9 taps
        for j in range(ksize):
            w = kw[i * ksize + j][None, None, :]            # (1, 1, TBC) lane vector
            acc = acc + w * xpad_ref[i:i + out_h, j:j + out_w, :]

    out_ref[...] = acc.astype(out_ref.dtype)


def _pick_tbc(bc, in_h, in_w, out_h, out_w, pad, budget_bytes=20 * 1024 * 1024):
    """Largest lane-tile over B*C planes that fits the VMEM budget.

    Per plane (f32): 2x double-buffered input + 2x output + padded scratch.
    """
    per_plane = 4 * (2 * in_h * in_w + 2 * out_h * out_w
                     + (in_h + 2 * pad) * (in_w + 2 * pad))
    if bc <= 128 or bc * per_plane <= budget_bytes:
        return bc                                           # one (or full) block
    best = None
    cand = 128                                              # tile must be a multiple of 128
    while cand < bc:
        if bc % cand == 0 and cand * per_plane <= budget_bytes:
            best = cand
        cand += 128
    if best is not None:
        return best
    cand = 128                                              # nothing fits budget: smallest legal tile
    while cand < bc:
        if bc % cand == 0:
            return cand
        cand += 128
    return bc


def idr_ddc_forward(feat, deg, w1, w2, kernel_size):
    """feat: (B, C, H, W), deg: (B, C).
    w1: (C, C) first Linear weight (out, in); w2: (C*k*k, C) second Linear weight."""
    B, C, H, W = feat.shape
    k = kernel_size
    p = (k - 1) // 2
    OH = H + 2 * p - k + 1
    OW = W + 2 * p - k + 1
    BC = B * C
    # TODO(synk): even kernel_size would need PyTorch-style asymmetric padding.

    # --- kernel-generating MLP (tiny; plain XLA, keeps kw as a few-KB array) ---
    h = deg.astype(jnp.float32) @ w1.astype(jnp.float32).T
    h = jnp.where(h >= 0, h, 0.1 * h)                       # LeakyReLU(0.1)
    kw = h @ w2.astype(jnp.float32).T                       # (B, C*k*k)
    kw_t = kw.reshape(BC, k * k).T                          # (k*k, B*C): lanes = planes

    # --- channels-on-lanes feature layout (layout plumbing done by XLA) ---
    x_hwbc = jnp.transpose(feat.reshape(BC, H, W), (1, 2, 0))   # (H, W, B*C)

    TBC = _pick_tbc(BC, H, W, OH, OW, p)
    grid = (BC // TBC,)

    out_hwbc = pl.pallas_call(
        functools.partial(_ddc_conv_kernel, ksize=k, pad=p,
                          in_h=H, in_w=W, out_h=OH, out_w=OW),
        out_shape=jax.ShapeDtypeStruct((OH, OW, BC), feat.dtype),
        grid=grid,
        in_specs=[
            # per-plane taps: (k*k, TBC) tile in VMEM, broadcast along lanes
            pl.BlockSpec((k * k, TBC), lambda g: (0, g)),
            # TBC full spatial planes per step, planes on lanes
            pl.BlockSpec((H, W, TBC), lambda g: (0, 0, g)),
        ],
        out_specs=pl.BlockSpec((OH, OW, TBC), lambda g: (0, 0, g)),
        scratch_shapes=[pltpu.VMEM((H + 2 * p, W + 2 * p, TBC), jnp.float32)],
        compiler_params=pltpu.CompilerParams(
            dimension_semantics=("parallel",),          # shard bc tiles across TCs (v7x)
            vmem_limit_bytes=32 * 1024 * 1024,          # safe on v5e/v6e/v7x
        ),
    )(kw_t, x_hwbc)

    return jnp.transpose(out_hwbc, (2, 0, 1)).reshape(B, C, OH, OW)


def _reference(feat, deg, w1, w2, k):
    # pure-JAX reference mirroring the PyTorch module
    B, C, H, W = feat.shape
    p = (k - 1) // 2
    h = deg @ w1.T
    h = jnp.where(h >= 0, h, 0.1 * h)
    kw = h @ w2.T
    kern = kw.reshape(B * C, 1, k, k)
    out = jax.lax.conv_general_dilated(
        feat.reshape(1, B * C, H, W), kern, (1, 1), [(p, p), (p, p)],
        feature_group_count=B * C,
        dimension_numbers=("NCHW", "OIHW", "NCHW"))
    return out.reshape(B, C, out.shape[-2], out.shape[-1])


if __name__ == "__main__":
    B, C, H, W = 2, 4, 16, 16           # channels_in = channels_out = C
    kernel_size = 3                     # -> padding 1, same spatial size
    key = jax.random.PRNGKey(0)
    k1, k2, k3, k4 = jax.random.split(key, 4)

    feat = jax.random.normal(k1, (B, C, H, W), jnp.float32)     # x[0]
    deg = jax.random.normal(k2, (B, C), jnp.float32)            # x[1]
    # deterministic synthetic Linear weights (out_features, in_features), no bias
    w1 = 0.1 * jax.random.normal(k3, (C, C), jnp.float32)
    w2 = 0.1 * jax.random.normal(k4, (C * kernel_size * kernel_size, C), jnp.float32)

    out = idr_ddc_forward(feat, deg, w1, w2, kernel_size)
    jax.block_until_ready(out)

    ref = _reference(feat, deg, w1, w2, kernel_size)
    assert out.shape == (B, C, H, W)
    assert jnp.allclose(out, ref, atol=1e-4, rtol=1e-4)
    print("KERNEL_OK")
</pallas_src>

<mosaic_0001>
module attributes {stable_mosaic.version = 11 : i64} {
  func.func @_ddc_conv_kernel(%arg0: i32, %arg1: memref<9x8xf32, #tpu.memory_space<vmem>>, %arg2: memref<16x16x8xf32, #tpu.memory_space<vmem>>, %arg3: memref<16x16x8xf32, #tpu.memory_space<vmem>>, %arg4: memref<18x18x8xf32, #tpu.memory_space<vmem>>) attributes {dimension_semantics = [#tpu.dimension_semantics<parallel>], iteration_bounds = array<i64: 1>, scalar_prefetch = 0 : i64, scratch_operands = 1 : i64, tpu.core_type = #tpu.core_type<tc>, window_params = [{transform_indices = @transform_0, window_bounds = array<i64: 9, 8>}, {transform_indices = @transform_1, window_bounds = array<i64: 16, 16, 8>}, {transform_indices = @transform_2, window_bounds = array<i64: 16, 16, 8>}]} {
    %cst = arith.constant 0.000000e+00 : f32
    %0 = vector.broadcast %cst : f32 to vector<18x18x8xf32>
    %c0 = arith.constant 0 : index
    %c0_0 = arith.constant 0 : index
    %c0_1 = arith.constant 0 : index
    %1 = vector.load %arg4[%c0, %c0_0, %c0_1] : memref<18x18x8xf32, #tpu.memory_space<vmem>>, vector<18x18x8xf32>
    tpu.vector_store %arg4[%c0, %c0_0, %c0_1], %0 {strides = array<i32>} : memref<18x18x8xf32, #tpu.memory_space<vmem>>, vector<18x18x8xf32>,
    %c0_2 = arith.constant 0 : index
    %c0_3 = arith.constant 0 : index
    %c0_4 = arith.constant 0 : index
    %2 = vector.load %arg2[%c0_2, %c0_3, %c0_4] : memref<16x16x8xf32, #tpu.memory_space<vmem>>, vector<16x16x8xf32>
    %c1 = arith.constant 1 : index
    %c1_5 = arith.constant 1 : index
    %c0_6 = arith.constant 0 : index
    %3 = vector.load %arg4[%c1, %c1_5, %c0_6] : memref<18x18x8xf32, #tpu.memory_space<vmem>>, vector<16x16x8xf32>
    tpu.vector_store %arg4[%c1, %c1_5, %c0_6], %2 {strides = array<i32>} : memref<18x18x8xf32, #tpu.memory_space<vmem>>, vector<16x16x8xf32>,
    %c0_7 = arith.constant 0 : index
    %c0_8 = arith.constant 0 : index
    %4 = vector.load %arg1[%c0_7, %c0_8] : memref<9x8xf32, #tpu.memory_space<vmem>>, vector<9x8xf32>
    %cst_9 = arith.constant 0.000000e+00 : f32
    %5 = vector.broadcast %cst_9 : f32 to vector<16x16x8xf32>
    %6 = vector.extract_strided_slice %4 {offsets = [0, 0], sizes = [1, 8], strides = [1, 1]} : vector<9x8xf32> to vector<1x8xf32>
    %7 = vector.shape_cast %6 : vector<1x8xf32> to vector<8xf32>
    %8 = vector.shape_cast %7 : vector<8xf32> to vector<1x1x8xf32>
    %c0_10 = arith.constant 0 : index
    %c0_11 = arith.constant 0 : index
    %c0_12 = arith.constant 0 : index
    %9 = vector.load %arg4[%c0_10, %c0_11, %c0_12] : memref<18x18x8xf32, #tpu.memory_space<vmem>>, vector<16x16x8xf32>
    %10 = vector.broadcast %8 : vector<1x1x8xf32> to vector<16x16x8xf32>
    %11 = arith.mulf %10, %9 : vector<16x16x8xf32>
    %12 = arith.addf %5, %11 : vector<16x16x8xf32>
    %13 = vector.extract_strided_slice %4 {offsets = [1, 0], sizes = [1, 8], strides = [1, 1]} : vector<9x8xf32> to vector<1x8xf32>
    %14 = vector.shape_cast %13 : vector<1x8xf32> to vector<8xf32>
    %15 = vector.shape_cast %14 : vector<8xf32> to vector<1x1x8xf32>
    %c0_13 = arith.constant 0 : index
    %c1_14 = arith.constant 1 : index
    %c0_15 = arith.constant 0 : index
    %16 = vector.load %arg4[%c0_13, %c1_14, %c0_15] : memref<18x18x8xf32, #tpu.memory_space<vmem>>, vector<16x16x8xf32>
    %17 = vector.broadcast %15 : vector<1x1x8xf32> to vector<16x16x8xf32>
    %18 = arith.mulf %17, %16 : vector<16x16x8xf32>
    %19 = arith.addf %12, %18 : vector<16x16x8xf32>
    %20 = vector.extract_strided_slice %4 {offsets = [2, 0], sizes = [1, 8], strides = [1, 1]} : vector<9x8xf32> to vector<1x8xf32>
    %21 = vector.shape_cast %20 : vector<1x8xf32> to vector<8xf32>
    %22 = vector.shape_cast %21 : vector<8xf32> to vector<1x1x8xf32>
    %c0_16 = arith.constant 0 : index
    %c2 = arith.constant 2 : index
    %c0_17 = arith.constant 0 : index
    %23 = vector.load %arg4[%c0_16, %c2, %c0_17] : memref<18x18x8xf32, #tpu.memory_space<vmem>>, vector<16x16x8xf32>
    %24 = vector.broadcast %22 : vector<1x1x8xf32> to vector<16x16x8xf32>
    %25 = arith.mulf %24, %23 : vector<16x16x8xf32>
    %26 = arith.addf %19, %25 : vector<16x16x8xf32>
    %27 = vector.extract_strided_slice %4 {offsets = [3, 0], sizes = [1, 8], strides = [1, 1]} : vector<9x8xf32> to vector<1x8xf32>
    %28 = vector.shape_cast %27 : vector<1x8xf32> to vector<8xf32>
    %29 = vector.shape_cast %28 : vector<8xf32> to vector<1x1x8xf32>
    %c1_18 = arith.constant 1 : index
    %c0_19 = arith.constant 0 : index
    %c0_20 = arith.constant 0 : index
    %30 = vector.load %arg4[%c1_18, %c0_19, %c0_20] : memref<18x18x8xf32, #tpu.memory_space<vmem>>, vector<16x16x8xf32>
    %31 = vector.broadcast %29 : vector<1x1x8xf32> to vector<16x16x8xf32>
    %32 = arith.mulf %31, %30 : vector<16x16x8xf32>
    %33 = arith.addf %26, %32 : vector<16x16x8xf32>
    %34 = vector.extract_strided_slice %4 {offsets = [4, 0], sizes = [1, 8], strides = [1, 1]} : vector<9x8xf32> to vector<1x8xf32>
    %35 = vector.shape_cast %34 : vector<1x8xf32> to vector<8xf32>
    %36 = vector.shape_cast %35 : vector<8xf32> to vector<1x1x8xf32>
    %c1_21 = arith.constant 1 : index
    %c1_22 = arith.constant 1 : index
    %c0_23 = arith.constant 0 : index
    %37 = vector.load %arg4[%c1_21, %c1_22, %c0_23] : memref<18x18x8xf32, #tpu.memory_space<vmem>>, vector<16x16x8xf32>
    %38 = vector.broadcast %36 : vector<1x1x8xf32> to vector<16x16x8xf32>
    %39 = arith.mulf %38, %37 : vector<16x16x8xf32>
    %40 = arith.addf %33, %39 : vector<16x16x8xf32>
    %41 = vector.extract_strided_slice %4 {offsets = [5, 0], sizes = [1, 8], strides = [1, 1]} : vector<9x8xf32> to vector<1x8xf32>
    %42 = vector.shape_cast %41 : vector<1x8xf32> to vector<8xf32>
    %43 = vector.shape_cast %42 : vector<8xf32> to vector<1x1x8xf32>
    %c1_24 = arith.constant 1 : index
    %c2_25 = arith.constant 2 : index
    %c0_26 = arith.constant 0 : index
    %44 = vector.load %arg4[%c1_24, %c2_25, %c0_26] : memref<18x18x8xf32, #tpu.memory_space<vmem>>, vector<16x16x8xf32>
    %45 = vector.broadcast %43 : vector<1x1x8xf32> to vector<16x16x8xf32>
    %46 = arith.mulf %45, %44 : vector<16x16x8xf32>
    %47 = arith.addf %40, %46 : vector<16x16x8xf32>
    %48 = vector.extract_strided_slice %4 {offsets = [6, 0], sizes = [1, 8], strides = [1, 1]} : vector<9x8xf32> to vector<1x8xf32>
    %49 = vector.shape_cast %48 : vector<1x8xf32> to vector<8xf32>
    %50 = vector.shape_cast %49 : vector<8xf32> to vector<1x1x8xf32>
    %c2_27 = arith.constant 2 : index
    %c0_28 = arith.constant 0 : index
    %c0_29 = arith.constant 0 : index
    %51 = vector.load %arg4[%c2_27, %c0_28, %c0_29] : memref<18x18x8xf32, #tpu.memory_space<vmem>>, vector<16x16x8xf32>
    %52 = vector.broadcast %50 : vector<1x1x8xf32> to vector<16x16x8xf32>
    %53 = arith.mulf %52, %51 : vector<16x16x8xf32>
    %54 = arith.addf %47, %53 : vector<16x16x8xf32>
    %55 = vector.extract_strided_slice %4 {offsets = [7, 0], sizes = [1, 8], strides = [1, 1]} : vector<9x8xf32> to vector<1x8xf32>
    %56 = vector.shape_cast %55 : vector<1x8xf32> to vector<8xf32>
    %57 = vector.shape_cast %56 : vector<8xf32> to vector<1x1x8xf32>
    %c2_30 = arith.constant 2 : index
    %c1_31 = arith.constant 1 : index
    %c0_32 = arith.constant 0 : index
    %58 = vector.load %arg4[%c2_30, %c1_31, %c0_32] : memref<18x18x8xf32, #tpu.memory_space<vmem>>, vector<16x16x8xf32>
    %59 = vector.broadcast %57 : vector<1x1x8xf32> to vector<16x16x8xf32>
    %60 = arith.mulf %59, %58 : vector<16x16x8xf32>
    %61 = arith.addf %54, %60 : vector<16x16x8xf32>
    %62 = vector.extract_strided_slice %4 {offsets = [8, 0], sizes = [1, 8], strides = [1, 1]} : vector<9x8xf32> to vector<1x8xf32>
    %63 = vector.shape_cast %62 : vector<1x8xf32> to vector<8xf32>
    %64 = vector.shape_cast %63 : vector<8xf32> to vector<1x1x8xf32>
    %c2_33 = arith.constant 2 : index
    %c2_34 = arith.constant 2 : index
    %c0_35 = arith.constant 0 : index
    %65 = vector.load %arg4[%c2_33, %c2_34, %c0_35] : memref<18x18x8xf32, #tpu.memory_space<vmem>>, vector<16x16x8xf32>
    %66 = vector.broadcast %64 : vector<1x1x8xf32> to vector<16x16x8xf32>
    %67 = arith.mulf %66, %65 : vector<16x16x8xf32>
    %68 = arith.addf %61, %67 : vector<16x16x8xf32>
    %c0_36 = arith.constant 0 : index
    %c0_37 = arith.constant 0 : index
    %c0_38 = arith.constant 0 : index
    %69 = vector.load %arg3[%c0_36, %c0_37, %c0_38] : memref<16x16x8xf32, #tpu.memory_space<vmem>>, vector<16x16x8xf32>
    tpu.vector_store %arg3[%c0_36, %c0_37, %c0_38], %68 {strides = array<i32>} : memref<16x16x8xf32, #tpu.memory_space<vmem>>, vector<16x16x8xf32>,
    return
  }
  func.func @transform_0(%arg0: i32) -> (i32, i32) {
    %c0_i32 = arith.constant 0 : i32
    %c0_i32_0 = arith.constant 0 : i32
    return %c0_i32, %arg0 : i32, i32
  }
  func.func @transform_1(%arg0: i32) -> (i32, i32, i32) {
    %c0_i32 = arith.constant 0 : i32
    %c0_i32_0 = arith.constant 0 : i32
    %c0_i32_1 = arith.constant 0 : i32
    return %c0_i32, %c0_i32_0, %arg0 : i32, i32, i32
  }
  func.func @transform_2(%arg0: i32) -> (i32, i32, i32) {
    %c0_i32 = arith.constant 0 : i32
    %c0_i32_0 = arith.constant 0 : i32
    %c0_i32_1 = arith.constant 0 : i32
    return %c0_i32, %c0_i32_0, %arg0 : i32, i32, i32
  }
}

</mosaic_0001>

<llo_original>
// kernel: tpu_custom_call.1
$region0: #{tpu_custom_call.1}
  #allocation0 [shape = 'u32[]', space=smem, size = 0x4, offset = 0x4, fixed_abs, tag = 'smem constant byte address 0x4 - core index']
  #allocation1 [shape = 'u32[72,128]{1,0:T(1,128)}', space=vmem, size = 0x9000, scoped, tag = 'internal scratch']
  #allocation2 [shape = 'f32[18,18,8]{2,1,0:T(8,128)}', space=vmem, size = 0x36000, scoped, tag = 'scratch operand']
  %s0 = inlined_call_operand.vmem [shape: f32[9,8], index: 0, kind: input, shape index: {}]
  %s1 = inlined_call_operand.vmem [shape: f32[16,16,8], index: 1, kind: input, shape index: {}]
  %s2 = inlined_call_operand.vmem [shape: f32[16,16,8], index: 2, kind: output, shape index: {}]
  %s3 = sld [smem:[#allocation0]]
  $region18: #{tpu_custom_call.1} parent=0
    _
  %s5 = ssub.s32 1, %s3
  %s6 = scalar_select 0, %s5, %s3
  // Predicated region
  $region2: #{tpu_custom_call.1} parent=0 // pred_check
    _
  $region3: #{tpu_custom_call.1} parent=0 // pred_check_branch
    %8 = sbr.rel (0) target = $region5
  $region4: #{tpu_custom_call.1} parent=0 // pred_region
    _
  $region5: #{tpu_custom_call.1} parent=0 // pred_fallthru
    _
  // Predicated region
  $region6: #{tpu_custom_call.1} parent=0 // pred_check
    _
  $region7: #{tpu_custom_call.1} parent=0 // pred_check_branch
    %10 = sbr.rel (0) target = $region9
  $region8: #{tpu_custom_call.1} parent=0 // pred_region
    _
  $region9: #{tpu_custom_call.1} parent=0 // pred_fallthru
    _
  %vm11 = vcmask 64512
  %12 = vst.msk [vmem:[#allocation2] sm:$0xff] %vm11, 0.0
  %13 = vst.msk [vmem:[#allocation2 + $0x8] sm:$0xff] %vm11, 0.0
  %vm14 = vcmask 58368
  %15 = vst.msk [vmem:[#allocation2 + $0x10] sm:$0x3] %vm14, 0.0
  %16 = vst.msk [vmem:[#allocation2 + $0x18] sm:$0xff] %vm11, 0.0
  %17 = vst.msk [vmem:[#allocation2 + $0x20] sm:$0xff] %vm11, 0.0
  %18 = vst.msk [vmem:[#allocation2 + $0x28] sm:$0x3] %vm14, 0.0
  %19 = vst.msk [vmem:[#allocation2 + $0x30] sm:$0xff] %vm11, 0.0
  %20 = vst.msk [vmem:[#allocation2 + $0x38] sm:$0xff] %vm11, 0.0
  %21 = vst.msk [vmem:[#allocation2 + $0x40] sm:$0x3] %vm14, 0.0
  %22 = vst.msk [vmem:[#allocation2 + $0x48] sm:$0xff] %vm11, 0.0
  %23 = vst.msk [vmem:[#allocation2 + $0x50] sm:$0xff] %vm11, 0.0
  %24 = vst.msk [vmem:[#allocation2 + $0x58] sm:$0x3] %vm14, 0.0
  %25 = vst.msk [vmem:[#allocation2 + $0x60] sm:$0xff] %vm11, 0.0
  %26 = vst.msk [vmem:[#allocation2 + $0x68] sm:$0xff] %vm11, 0.0
  %27 = vst.msk [vmem:[#allocation2 + $0x70] sm:$0x3] %vm14, 0.0
  %28 = vst.msk [vmem:[#allocation2 + $0x78] sm:$0xff] %vm11, 0.0
  %29 = vst.msk [vmem:[#allocation2 + $0x80] sm:$0xff] %vm11, 0.0
  %30 = vst.msk [vmem:[#allocation2 + $0x88] sm:$0x3] %vm14, 0.0
  %31 = vst.msk [vmem:[#allocation2 + $0x90] sm:$0xff] %vm11, 0.0
  %32 = vst.msk [vmem:[#allocation2 + $0x98] sm:$0xff] %vm11, 0.0
  %33 = vst.msk [vmem:[#allocation2 + $0xa0] sm:$0x3] %vm14, 0.0
  %34 = vst.msk [vmem:[#allocation2 + $0xa8] sm:$0xff] %vm11, 0.0
  %35 = vst.msk [vmem:[#allocation2 + $0xb0] sm:$0xff] %vm11, 0.0
  %36 = vst.msk [vmem:[#allocation2 + $0xb8] sm:$0x3] %vm14, 0.0
  %37 = vst.msk [vmem:[#allocation2 + $0xc0] sm:$0xff] %vm11, 0.0
  %38 = vst.msk [vmem:[#allocation2 + $0xc8] sm:$0xff] %vm11, 0.0
  %39 = vst.msk [vmem:[#allocation2 + $0xd0] sm:$0x3] %vm14, 0.0
  %40 = vst.msk [vmem:[#allocation2 + $0xd8] sm:$0xff] %vm11, 0.0
  %41 = vst.msk [vmem:[#allocation2 + $0xe0] sm:$0xff] %vm11, 0.0
  %42 = vst.msk [vmem:[#allocation2 + $0xe8] sm:$0x3] %vm14, 0.0
  %43 = vst.msk [vmem:[#allocation2 + $0xf0] sm:$0xff] %vm11, 0.0
  %44 = vst.msk [vmem:[#allocation2 + $0xf8] sm:$0xff] %vm11, 0.0
  %45 = vst.msk [vmem:[#allocation2 + $0x100] sm:$0x3] %vm14, 0.0
  %46 = vst.msk [vmem:[#allocation2 + $0x108] sm:$0xff] %vm11, 0.0
  %47 = vst.msk [vmem:[#allocation2 + $0x110] sm:$0xff] %vm11, 0.0
  %48 = vst.msk [vmem:[#allocation2 + $0x118] sm:$0x3] %vm14, 0.0
  %49 = vst.msk [vmem:[#allocation2 + $0x120] sm:$0xff] %vm11, 0.0
  %50 = vst.msk [vmem:[#allocation2 + $0x128] sm:$0xff] %vm11, 0.0
  %51 = vst.msk [vmem:[#allocation2 + $0x130] sm:$0x3] %vm14, 0.0
  %52 = vst.msk [vmem:[#allocation2 + $0x138] sm:$0xff] %vm11, 0.0
  %53 = vst.msk [vmem:[#allocation2 + $0x140] sm:$0xff] %vm11, 0.0
  %54 = vst.msk [vmem:[#allocation2 + $0x148] sm:$0x3] %vm14, 0.0
  %55 = vst.msk [vmem:[#allocation2 + $0x150] sm:$0xff] %vm11, 0.0
  %56 = vst.msk [vmem:[#allocation2 + $0x158] sm:$0xff] %vm11, 0.0
  %57 = vst.msk [vmem:[#allocation2 + $0x160] sm:$0x3] %vm14, 0.0
  %58 = vst.msk [vmem:[#allocation2 + $0x168] sm:$0xff] %vm11, 0.0
  %59 = vst.msk [vmem:[#allocation2 + $0x170] sm:$0xff] %vm11, 0.0
  %60 = vst.msk [vmem:[#allocation2 + $0x178] sm:$0x3] %vm14, 0.0
  %61 = vst.msk [vmem:[#allocation2 + $0x180] sm:$0xff] %vm11, 0.0
  %62 = vst.msk [vmem:[#allocation2 + $0x188] sm:$0xff] %vm11, 0.0
  %63 = vst.msk [vmem:[#allocation2 + $0x190] sm:$0x3] %vm14, 0.0
  %64 = vst.msk [vmem:[#allocation2 + $0x198] sm:$0xff] %vm11, 0.0
  %65 = vst.msk [vmem:[#allocation2 + $0x1a0] sm:$0xff] %vm11, 0.0
  %66 = vst.msk [vmem:[#allocation2 + $0x1a8] sm:$0x3] %vm14, 0.0
  %v67 = vld [vmem:[%s1] sm:$0xff]
  %v68 = vld [vmem:[%s1 + $0x8] sm:$0xff]
  %v69 = vld [vmem:[%s1 + $0x10] sm:$0xff]
  %v70 = vld [vmem:[%s1 + $0x18] sm:$0xff]
  %v71 = vld [vmem:[%s1 + $0x20] sm:$0xff]
  %v72 = vld [vmem:[%s1 + $0x28] sm:$0xff]
  %v73 = vld [vmem:[%s1 + $0x30] sm:$0xff]
  %v74 = vld [vmem:[%s1 + $0x38] sm:$0xff]
  %v75 = vld [vmem:[%s1 + $0x40] sm:$0xff]
  %v76 = vld [vmem:[%s1 + $0x48] sm:$0xff]
  %v77 = vld [vmem:[%s1 + $0x50] sm:$0xff]
  %v78 = vld [vmem:[%s1 + $0x58] sm:$0xff]
  %v79 = vld [vmem:[%s1 + $0x60] sm:$0xff]
  %v80 = vld [vmem:[%s1 + $0x68] sm:$0xff]
  %v81 = vld [vmem:[%s1 + $0x70] sm:$0xff]
  %v82 = vld [vmem:[%s1 + $0x78] sm:$0xff]
  %v83 = vld [vmem:[%s1 + $0x80] sm:$0xff]
  %v84 = vld [vmem:[%s1 + $0x88] sm:$0xff]
  %v85 = vld [vmem:[%s1 + $0x90] sm:$0xff]
  %v86 = vld [vmem:[%s1 + $0x98] sm:$0xff]
  %v87 = vld [vmem:[%s1 + $0xa0] sm:$0xff]
  %v88 = vld [vmem:[%s1 + $0xa8] sm:$0xff]
  %v89 = vld [vmem:[%s1 + $0xb0] sm:$0xff]
  %v90 = vld [vmem:[%s1 + $0xb8] sm:$0xff]
  %v91 = vld [vmem:[%s1 + $0xc0] sm:$0xff]
  %v92 = vld [vmem:[%s1 + $0xc8] sm:$0xff]
  %v93 = vld [vmem:[%s1 + $0xd0] sm:$0xff]
  %v94 = vld [vmem:[%s1 + $0xd8] sm:$0xff]
  %v95 = vld [vmem:[%s1 + $0xe0] sm:$0xff]
  %v96 = vld [vmem:[%s1 + $0xe8] sm:$0xff]
  %v97 = vld [vmem:[%s1 + $0xf0] sm:$0xff]
  %v98 = vld [vmem:[%s1 + $0xf8] sm:$0xff]
  %s99 = scalar_lea.vmem [#allocation2], 24
  %100 = vst.msk [vmem:[%s99 + $0x1] sm:$0xff] %vm11, %v67
  %101 = vst.msk [vmem:[%s99 + $0x9] sm:$0xff] %vm11, %v68
  %102 = vst.msk [vmem:[%s99 + $0x19] sm:$0xff] %vm11, %v69
  %103 = vst.msk [vmem:[%s99 + $0x21] sm:$0xff] %vm11, %v70
  %104 = vst.msk [vmem:[%s99 + $0x31] sm:$0xff] %vm11, %v71
  %105 = vst.msk [vmem:[%s99 + $0x39] sm:$0xff] %vm11, %v72
  %106 = vst.msk [vmem:[%s99 + $0x49] sm:$0xff] %vm11, %v73
  %107 = vst.msk [vmem:[%s99 + $0x51] sm:$0xff] %vm11, %v74
  %108 = vst.msk [vmem:[%s99 + $0x61] sm:$0xff] %vm11, %v75
  %109 = vst.msk [vmem:[%s99 + $0x69] sm:$0xff] %vm11, %v76
  %110 = vst.msk [vmem:[%s99 + $0x79] sm:$0xff] %vm11, %v77
  %111 = vst.msk [vmem:[%s99 + $0x81] sm:$0xff] %vm11, %v78
  %112 = vst.msk [vmem:[%s99 + $0x91] sm:$0xff] %vm11, %v79
  %113 = vst.msk [vmem:[%s99 + $0x99] sm:$0xff] %vm11, %v80
  %114 = vst.msk [vmem:[%s99 + $0xa9] sm:$0xff] %vm11, %v81
  %115 = vst.msk [vmem:[%s99 + $0xb1] sm:$0xff] %vm11, %v82
  %116 = vst.msk [vmem:[%s99 + $0xc1] sm:$0xff] %vm11, %v83
  %117 = vst.msk [vmem:[%s99 + $0xc9] sm:$0xff] %vm11, %v84
  %118 = vst.msk [vmem:[%s99 + $0xd9] sm:$0xff] %vm11, %v85
  %119 = vst.msk [vmem:[%s99 + $0xe1] sm:$0xff] %vm11, %v86
  %120 = vst.msk [vmem:[%s99 + $0xf1] sm:$0xff] %vm11, %v87
  %121 = vst.msk [vmem:[%s99 + $0xf9] sm:$0xff] %vm11, %v88
  %122 = vst.msk [vmem:[%s99 + $0x109] sm:$0xff] %vm11, %v89
  %123 = vst.msk [vmem:[%s99 + $0x111] sm:$0xff] %vm11, %v90
  %124 = vst.msk [vmem:[%s99 + $0x121] sm:$0xff] %vm11, %v91
  %125 = vst.msk [vmem:[%s99 + $0x129] sm:$0xff] %vm11, %v92
  %126 = vst.msk [vmem:[%s99 + $0x139] sm:$0xff] %vm11, %v93
  %127 = vst.msk [vmem:[%s99 + $0x141] sm:$0xff] %vm11, %v94
  %128 = vst.msk [vmem:[%s99 + $0x151] sm:$0xff] %vm11, %v95
  %129 = vst.msk [vmem:[%s99 + $0x159] sm:$0xff] %vm11, %v96
  %130 = vst.msk [vmem:[%s99 + $0x169] sm:$0xff] %vm11, %v97
  %131 = vst.msk [vmem:[%s99 + $0x171] sm:$0xff] %vm11, %v98
  %v132 = vld [vmem:[%s0] sm:$0xff]
  %v133 = vld [vmem:[%s0 + $0x8] sm:$0x1]
  %v134 = vld [vmem:[#allocation2] sm:$0xff]
  %v135 = vld [vmem:[#allocation2 + $0x8] sm:$0xff]
  %v136 = vld [vmem:[#allocation2 + $0x18] sm:$0xff]
  %v137 = vld [vmem:[#allocation2 + $0x20] sm:$0xff]
  %v138 = vld [vmem:[#allocation2 + $0x30] sm:$0xff]
  %v139 = vld [vmem:[#allocation2 + $0x38] sm:$0xff]
  %v140 = vld [vmem:[#allocation2 + $0x48] sm:$0xff]
  %v141 = vld [vmem:[#allocation2 + $0x50] sm:$0xff]
  %v142 = vld [vmem:[#allocation2 + $0x60] sm:$0xff]
  %v143 = vld [vmem:[#allocation2 + $0x68] sm:$0xff]
  %v144 = vld [vmem:[#allocation2 + $0x78] sm:$0xff]
  %v145 = vld [vmem:[#allocation2 + $0x80] sm:$0xff]
  %v146 = vld [vmem:[#allocation2 + $0x90] sm:$0xff]
  %v147 = vld [vmem:[#allocation2 + $0x98] sm:$0xff]
  %v148 = vld [vmem:[#allocation2 + $0xa8] sm:$0xff]
  %v149 = vld [vmem:[#allocation2 + $0xb0] sm:$0xff]
  %v150 = vld [vmem:[#allocation2 + $0xc0] sm:$0xff]
  %v151 = vld [vmem:[#allocation2 + $0xc8] sm:$0xff]
  %v152 = vld [vmem:[#allocation2 + $0xd8] sm:$0xff]
  %v153 = vld [vmem:[#allocation2 + $0xe0] sm:$0xff]
  %v154 = vld [vmem:[#allocation2 + $0xf0] sm:$0xff]
  %v155 = vld [vmem:[#allocation2 + $0xf8] sm:$0xff]
  %v156 = vld [vmem:[#allocation2 + $0x108] sm:$0xff]
  %v157 = vld [vmem:[#allocation2 + $0x110] sm:$0xff]
  %v158 = vld [vmem:[#allocation2 + $0x120] sm:$0xff]
  %v159 = vld [vmem:[#allocation2 + $0x128] sm:$0xff]
  %v160 = vld [vmem:[#allocation2 + $0x138] sm:$0xff]
  %v161 = vld [vmem:[#allocation2 + $0x140] sm:$0xff]
  %v162 = vld [vmem:[#allocation2 + $0x150] sm:$0xff]
  %v163 = vld [vmem:[#allocation2 + $0x158] sm:$0xff]
  %v164 = vld [vmem:[#allocation2 + $0x168] sm:$0xff]
  %v165 = vld [vmem:[#allocation2 + $0x170] sm:$0xff]
  %v166 = vperm.slane %v132, 0
  %v167 = vmul.f32 %v166, %v134
  %v168 = vmul.f32 %v166, %v135
  %v169 = vmul.f32 %v166, %v136
  %v170 = vmul.f32 %v166, %v137
  %v171 = vmul.f32 %v166, %v138
  %v172 = vmul.f32 %v166, %v139
  %v173 = vmul.f32 %v166, %v140
  %v174 = vmul.f32 %v166, %v141
  %v175 = vmul.f32 %v166, %v142
  %v176 = vmul.f32 %v166, %v143
  %v177 = vmul.f32 %v166, %v144
  %v178 = vmul.f32 %v166, %v145
  %v179 = vmul.f32 %v166, %v146
  %v180 = vmul.f32 %v166, %v147
  %v181 = vmul.f32 %v166, %v148
  %v182 = vmul.f32 %v166, %v149
  %v183 = vmul.f32 %v166, %v150
  %v184 = vmul.f32 %v166, %v151
  %v185 = vmul.f32 %v166, %v152
  %v186 = vmul.f32 %v166, %v153
  %v187 = vmul.f32 %v166, %v154
  %v188 = vmul.f32 %v166, %v155
  %v189 = vmul.f32 %v166, %v156
  %v190 = vmul.f32 %v166, %v157
  %v191 = vmul.f32 %v166, %v158
  %v192 = vmul.f32 %v166, %v159
  %v193 = vmul.f32 %v166, %v160
  %v194 = vmul.f32 %v166, %v161
  %v195 = vmul.f32 %v166, %v162
  %v196 = vmul.f32 %v166, %v163
  %v197 = vmul.f32 %v166, %v164
  %v198 = vmul.f32 %v166, %v165
  %v199 = vadd.f32 %v167, 0.0
  %v200 = vadd.f32 %v168, 0.0
  %v201 = vadd.f32 %v169, 0.0
  %v202 = vadd.f32 %v170, 0.0
  %v203 = vadd.f32 %v171, 0.0
  %v204 = vadd.f32 %v172, 0.0
  %v205 = vadd.f32 %v173, 0.0
  %v206 = vadd.f32 %v174, 0.0
  %v207 = vadd.f32 %v175, 0.0
  %v208 = vadd.f32 %v176, 0.0
  %v209 = vadd.f32 %v177, 0.0
  %v210 = vadd.f32 %v178, 0.0
  %v211 = vadd.f32 %v179, 0.0
  %v212 = vadd.f32 %v180, 0.0
  %v213 = vadd.f32 %v181, 0.0
  %v214 = vadd.f32 %v182, 0.0
  %v215 = vadd.f32 %v183, 0.0
  %v216 = vadd.f32 %v184, 0.0
  %v217 = vadd.f32 %v185, 0.0
  %v218 = vadd.f32 %v186, 0.0
  %v219 = vadd.f32 %v187, 0.0
  %v220 = vadd.f32 %v188, 0.0
  %v221 = vadd.f32 %v189, 0.0
  %v222 = vadd.f32 %v190, 0.0
  %v223 = vadd.f32 %v191, 0.0
  %v224 = vadd.f32 %v192, 0.0
  %v225 = vadd.f32 %v193, 0.0
  %v226 = vadd.f32 %v194, 0.0
  %v227 = vadd.f32 %v195, 0.0
  %v228 = vadd.f32 %v196, 0.0
  %v229 = vadd.f32 %v197, 0.0
  %v230 = vadd.f32 %v198, 0.0
  %v231 = vld [vmem:[#allocation2 + $0x1] sm:$0xff]
  %v232 = vld [vmem:[#allocation2 + $0x9] sm:$0xff]
  %v233 = vld [vmem:[#allocation2 + $0x19] sm:$0xff]
  %v234 = vld [vmem:[#allocation2 + $0x21] sm:$0xff]
  %v235 = vld [vmem:[#allocation2 + $0x31] sm:$0xff]
  %v236 = vld [vmem:[#allocation2 + $0x39] sm:$0xff]
  %v237 = vld [vmem:[#allocation2 + $0x49] sm:$0xff]
  %v238 = vld [vmem:[#allocation2 + $0x51] sm:$0xff]
  %v239 = vld [vmem:[#allocation2 + $0x61] sm:$0xff]
  %v240 = vld [vmem:[#allocation2 + $0x69] sm:$0xff]
  %v241 = vld [vmem:[#allocation2 + $0x79] sm:$0xff]
  %v242 = vld [vmem:[#allocation2 + $0x81] sm:$0xff]
  %v243 = vld [vmem:[#allocation2 + $0x91] sm:$0xff]
  %v244 = vld [vmem:[#allocation2 + $0x99] sm:$0xff]
  %v245 = vld [vmem:[#allocation2 + $0xa9] sm:$0xff]
  %v246 = vld [vmem:[#allocation2 + $0xb1] sm:$0xff]
  %v247 = vld [vmem:[#allocation2 + $0xc1] sm:$0xff]
  %v248 = vld [vmem:[#allocation2 + $0xc9] sm:$0xff]
  %v249 = vld [vmem:[#allocation2 + $0xd9] sm:$0xff]
  %v250 = vld [vmem:[#allocation2 + $0xe1] sm:$0xff]
  %v251 = vld [vmem:[#allocation2 + $0xf1] sm:$0xff]
  %v252 = vld [vmem:[#allocation2 + $0xf9] sm:$0xff]
  %v253 = vld [vmem:[#allocation2 + $0x109] sm:$0xff]
  %v254 = vld [vmem:[#allocation2 + $0x111] sm:$0xff]
  %v255 = vld [vmem:[#allocation2 + $0x121] sm:$0xff]
  %v256 = vld [vmem:[#allocation2 + $0x129] sm:$0xff]
  %v257 = vld [vmem:[#allocation2 + $0x139] sm:$0xff]
  %v258 = vld [vmem:[#allocation2 + $0x141] sm:$0xff]
  %v259 = vld [vmem:[#allocation2 + $0x151] sm:$0xff]
  %v260 = vld [vmem:[#allocation2 + $0x159] sm:$0xff]
  %v261 = vld [vmem:[#allocation2 + $0x169] sm:$0xff]
  %v262 = vld [vmem:[#allocation2 + $0x171] sm:$0xff]
  %v263 = vperm.slane %v132, 1
  %v264 = vmul.f32 %v263, %v231
  %v265 = vmul.f32 %v263, %v232
  %v266 = vmul.f32 %v263, %v233
  %v267 = vmul.f32 %v263, %v234
  %v268 = vmul.f32 %v263, %v235
  %v269 = vmul.f32 %v263, %v236
  %v270 = vmul.f32 %v263, %v237
  %v271 = vmul.f32 %v263, %v238
  %v272 = vmul.f32 %v263, %v239
  %v273 = vmul.f32 %v263, %v240
  %v274 = vmul.f32 %v263, %v241
  %v275 = vmul.f32 %v263, %v242
  %v276 = vmul.f32 %v263, %v243
  %v277 = vmul.f32 %v263, %v244
  %v278 = vmul.f32 %v263, %v245
  %v279 = vmul.f32 %v263, %v246
  %v280 = vmul.f32 %v263, %v247
  %v281 = vmul.f32 %v263, %v248
  %v282 = vmul.f32 %v263, %v249
  %v283 = vmul.f32 %v263, %v250
  %v284 = vmul.f32 %v263, %v251
  %v285 = vmul.f32 %v263, %v252
  %v286 = vmul.f32 %v263, %v253
  %v287 = vmul.f32 %v263, %v254
  %v288 = vmul.f32 %v263, %v255
  %v289 = vmul.f32 %v263, %v256
  %v290 = vmul.f32 %v263, %v257
  %v291 = vmul.f32 %v263, %v258
  %v292 = vmul.f32 %v263, %v259
  %v293 = vmul.f32 %v263, %v260
  %v294 = vmul.f32 %v263, %v261
  %v295 = vmul.f32 %v263, %v262
  %v296 = vadd.f32 %v199, %v264
  %v297 = vadd.f32 %v200, %v265
  %v298 = vadd.f32 %v201, %v266
  %v299 = vadd.f32 %v202, %v267
  %v300 = vadd.f32 %v203, %v268
  %v301 = vadd.f32 %v204, %v269
  %v302 = vadd.f32 %v205, %v270
  %v303 = vadd.f32 %v206, %v271
  %v304 = vadd.f32 %v207, %v272
  %v305 = vadd.f32 %v208, %v273
  %v306 = vadd.f32 %v209, %v274
  %v307 = vadd.f32 %v210, %v275
  %v308 = vadd.f32 %v211, %v276
  %v309 = vadd.f32 %v212, %v277
  %v310 = vadd.f32 %v213, %v278
  %v311 = vadd.f32 %v214, %v279
  %v312 = vadd.f32 %v215, %v280
  %v313 = vadd.f32 %v216, %v281
  %v314 = vadd.f32 %v217, %v282
  %v315 = vadd.f32 %v218, %v283
  %v316 = vadd.f32 %v219, %v284
  %v317 = vadd.f32 %v220, %v285
  %v318 = vadd.f32 %v221, %v286
  %v319 = vadd.f32 %v222, %v287
  %v320 = vadd.f32 %v223, %v288
  %v321 = vadd.f32 %v224, %v289
  %v322 = vadd.f32 %v225, %v290
  %v323 = vadd.f32 %v226, %v291
  %v324 = vadd.f32 %v227, %v292
  %v325 = vadd.f32 %v228, %v293
  %v326 = vadd.f32 %v229, %v294
  %v327 = vadd.f32 %v230, %v295
  %v328 = vld [vmem:[#allocation2 + $0x2] sm:$0xff]
  %v329 = vld [vmem:[#allocation2 + $0xa] sm:$0xff]
  %v330 = vld [vmem:[#allocation2 + $0x1a] sm:$0xff]
  %v331 = vld [vmem:[#allocation2 + $0x22] sm:$0xff]
  %v332 = vld [vmem:[#allocation2 + $0x32] sm:$0xff]
  %v333 = vld [vmem:[#allocation2 + $0x3a] sm:$0xff]
  %v334 = vld [vmem:[#allocation2 + $0x4a] sm:$0xff]
  %v335 = vld [vmem:[#allocation2 + $0x52] sm:$0xff]
  %v336 = vld [vmem:[#allocation2 + $0x62] sm:$0xff]
  %v337 = vld [vmem:[#allocation2 + $0x6a] sm:$0xff]
  %v338 = vld [vmem:[#allocation2 + $0x7a] sm:$0xff]
  %v339 = vld [vmem:[#allocation2 + $0x82] sm:$0xff]
  %v340 = vld [vmem:[#allocation2 + $0x92] sm:$0xff]
  %v341 = vld [vmem:[#allocation2 + $0x9a] sm:$0xff]
  %v342 = vld [vmem:[#allocation2 + $0xaa] sm:$0xff]
  %v343 = vld [vmem:[#allocation2 + $0xb2] sm:$0xff]
  %v344 = vld [vmem:[#allocation2 + $0xc2] sm:$0xff]
  %v345 = vld [vmem:[#allocation2 + $0xca] sm:$0xff]
  %v346 = vld [vmem:[#allocation2 + $0xda] sm:$0xff]
  %v347 = vld [vmem:[#allocation2 + $0xe2] sm:$0xff]
  %v348 = vld [vmem:[#allocation2 + $0xf2] sm:$0xff]
  %v349 = vld [vmem:[#allocation2 + $0xfa] sm:$0xff]
  %v350 = vld [vmem:[#allocation2 + $0x10a] sm:$0xff]
  %v351 = vld [vmem:[#allocation2 + $0x112] sm:$0xff]
  %v352 = vld [vmem:[#allocation2 + $0x122] sm:$0xff]
  %v353 = vld [vmem:[#allocation2 + $0x12a] sm:$0xff]
  %v354 = vld [vmem:[#allocation2 + $0x13a] sm:$0xff]
  %v355 = vld [vmem:[#allocation2 + $0x142] sm:$0xff]
  %v356 = vld [vmem:[#allocation2 + $0x152] sm:$0xff]
  %v357 = vld [vmem:[#allocation2 + $0x15a] sm:$0xff]
  %v358 = vld [vmem:[#allocation2 + $0x16a] sm:$0xff]
  %v359 = vld [vmem:[#allocation2 + $0x172] sm:$0xff]
  %v360 = vperm.slane %v132, 2
  %v361 = vmul.f32 %v360, %v328
  %v362 = vmul.f32 %v360, %v329
  %v363 = vmul.f32 %v360, %v330
  %v364 = vmul.f32 %v360, %v331
  %v365 = vmul.f32 %v360, %v332
  %v366 = vmul.f32 %v360, %v333
  %v367 = vmul.f32 %v360, %v334
  %v368 = vmul.f32 %v360, %v335
  %v369 = vmul.f32 %v360, %v336
  %v370 = vmul.f32 %v360, %v337
  %v371 = vmul.f32 %v360, %v338
  %v372 = vmul.f32 %v360, %v339
  %v373 = vmul.f32 %v360, %v340
  %v374 = vmul.f32 %v360, %v341
  %v375 = vmul.f32 %v360, %v342
  %v376 = vmul.f32 %v360, %v343
  %v377 = vmul.f32 %v360, %v344
  %v378 = vmul.f32 %v360, %v345
  %v379 = vmul.f32 %v360, %v346
  %v380 = vmul.f32 %v360, %v347
  %v381 = vmul.f32 %v360, %v348
  %v382 = vmul.f32 %v360, %v349
  %v383 = vmul.f32 %v360, %v350
  %v384 = vmul.f32 %v360, %v351
  %v385 = vmul.f32 %v360, %v352
  %v386 = vmul.f32 %v360, %v353
  %v387 = vmul.f32 %v360, %v354
  %v388 = vmul.f32 %v360, %v355
  %v389 = vmul.f32 %v360, %v356
  %v390 = vmul.f32 %v360, %v357
  %v391 = vmul.f32 %v360, %v358
  %v392 = vmul.f32 %v360, %v359
  %v393 = vadd.f32 %v296, %v361
  %v394 = vadd.f32 %v297, %v362
  %v395 = vadd.f32 %v298, %v363
  %v396 = vadd.f32 %v299, %v364
  %v397 = vadd.f32 %v300, %v365
  %v398 = vadd.f32 %v301, %v366
  %v399 = vadd.f32 %v302, %v367
  %v400 = vadd.f32 %v303, %v368
  %v401 = vadd.f32 %v304, %v369
  %v402 = vadd.f32 %v305, %v370
  %v403 = vadd.f32 %v306, %v371
  %v404 = vadd.f32 %v307, %v372
  %v405 = vadd.f32 %v308, %v373
  %v406 = vadd.f32 %v309, %v374
  %v407 = vadd.f32 %v310, %v375
  %v408 = vadd.f32 %v311, %v376
  %v409 = vadd.f32 %v312, %v377
  %v410 = vadd.f32 %v313, %v378
  %v411 = vadd.f32 %v314, %v379
  %v412 = vadd.f32 %v315, %v380
  %v413 = vadd.f32 %v316, %v381
  %v414 = vadd.f32 %v317, %v382
  %v415 = vadd.f32 %v318, %v383
  %v416 = vadd.f32 %v319, %v384
  %v417 = vadd.f32 %v320, %v385
  %v418 = vadd.f32 %v321, %v386
  %v419 = vadd.f32 %v322, %v387
  %v420 = vadd.f32 %v323, %v388
  %v421 = vadd.f32 %v324, %v389
  %v422 = vadd.f32 %v325, %v390
  %v423 = vadd.f32 %v326, %v391
  %v424 = vadd.f32 %v327, %v392
  %v425 = vld [vmem:[%s99] sm:$0xff]
  %v426 = vld [vmem:[%s99 + $0x8] sm:$0xff]
  %v427 = vld [vmem:[%s99 + $0x18] sm:$0xff]
  %v428 = vld [vmem:[%s99 + $0x20] sm:$0xff]
  %v429 = vld [vmem:[%s99 + $0x30] sm:$0xff]
  %v430 = vld [vmem:[%s99 + $0x38] sm:$0xff]
  %v431 = vld [vmem:[%s99 + $0x48] sm:$0xff]
  %v432 = vld [vmem:[%s99 + $0x50] sm:$0xff]
  %v433 = vld [vmem:[%s99 + $0x60] sm:$0xff]
  %v434 = vld [vmem:[%s99 + $0x68] sm:$0xff]
  %v435 = vld [vmem:[%s99 + $0x78] sm:$0xff]
  %v436 = vld [vmem:[%s99 + $0x80] sm:$0xff]
  %v437 = vld [vmem:[%s99 + $0x90] sm:$0xff]
  %v438 = vld [vmem:[%s99 + $0x98] sm:$0xff]
  %v439 = vld [vmem:[%s99 + $0xa8] sm:$0xff]
  %v440 = vld [vmem:[%s99 + $0xb0] sm:$0xff]
  %v441 = vld [vmem:[%s99 + $0xc0] sm:$0xff]
  %v442 = vld [vmem:[%s99 + $0xc8] sm:$0xff]
  %v443 = vld [vmem:[%s99 + $0xd8] sm:$0xff]
  %v444 = vld [vmem:[%s99 + $0xe0] sm:$0xff]
  %v445 = vld [vmem:[%s99 + $0xf0] sm:$0xff]
  %v446 = vld [vmem:[%s99 + $0xf8] sm:$0xff]
  %v447 = vld [vmem:[%s99 + $0x108] sm:$0xff]
  %v448 = vld [vmem:[%s99 + $0x110] sm:$0xff]
  %v449 = vld [vmem:[%s99 + $0x120] sm:$0xff]
  %v450 = vld [vmem:[%s99 + $0x128] sm:$0xff]
  %v451 = vld [vmem:[%s99 + $0x138] sm:$0xff]
  %v452 = vld [vmem:[%s99 + $0x140] sm:$0xff]
  %v453 = vld [vmem:[%s99 + $0x150] sm:$0xff]
  %v454 = vld [vmem:[%s99 + $0x158] sm:$0xff]
  %v455 = vld [vmem:[%s99 + $0x168] sm:$0xff]
  %v456 = vld [vmem:[%s99 + $0x170] sm:$0xff]
  %v457 = vperm.slane %v132, 3
  %v458 = vmul.f32 %v457, %v425
  %v459 = vmul.f32 %v457, %v426
  %v460 = vmul.f32 %v457, %v427
  %v461 = vmul.f32 %v457, %v428
  %v462 = vmul.f32 %v457, %v429
  %v463 = vmul.f32 %v457, %v430
  %v464 = vmul.f32 %v457, %v431
  %v465 = vmul.f32 %v457, %v432
  %v466 = vmul.f32 %v457, %v433
  %v467 = vmul.f32 %v457, %v434
  %v468 = vmul.f32 %v457, %v435
  %v469 = vmul.f32 %v457, %v436
  %v470 = vmul.f32 %v457, %v437
  %v471 = vmul.f32 %v457, %v438
  %v472 = vmul.f32 %v457, %v439
  %v473 = vmul.f32 %v457, %v440
  %v474 = vmul.f32 %v457, %v441
  %v475 = vmul.f32 %v457, %v442
  %v476 = vmul.f32 %v457, %v443
  %v477 = vmul.f32 %v457, %v444
  %v478 = vmul.f32 %v457, %v445
  %v479 = vmul.f32 %v457, %v446
  %v480 = vmul.f32 %v457, %v447
  %v481 = vmul.f32 %v457, %v448
  %v482 = vmul.f32 %v457, %v449
  %v483 = vmul.f32 %v457, %v450
  %v484 = vmul.f32 %v457, %v451
  %v485 = vmul.f32 %v457, %v452
  %v486 = vmul.f32 %v457, %v453
  %v487 = vmul.f32 %v457, %v454
  %v488 = vmul.f32 %v457, %v455
  %v489 = vmul.f32 %v457, %v456
  %v490 = vadd.f32 %v393, %v458
  %v491 = vadd.f32 %v394, %v459
  %v492 = vadd.f32 %v395, %v460
  %v493 = vadd.f32 %v396, %v461
  %v494 = vadd.f32 %v397, %v462
  %v495 = vadd.f32 %v398, %v463
  %v496 = vadd.f32 %v399, %v464
  %v497 = vadd.f32 %v400, %v465
  %v498 = vadd.f32 %v401, %v466
  %v499 = vadd.f32 %v402, %v467
  %v500 = vadd.f32 %v403, %v468
  %v501 = vadd.f32 %v404, %v469
  %v502 = vadd.f32 %v405, %v470
  %v503 = vadd.f32 %v406, %v471
  %v504 = vadd.f32 %v407, %v472
  %v505 = vadd.f32 %v408, %v473
  %v506 = vadd.f32 %v409, %v474
  %v507 = vadd.f32 %v410, %v475
  %v508 = vadd.f32 %v411, %v476
  %v509 = vadd.f32 %v412, %v477
  %v510 = vadd.f32 %v413, %v478
  %v511 = vadd.f32 %v414, %v479
  %v512 = vadd.f32 %v415, %v480
  %v513 = vadd.f32 %v416, %v481
  %v514 = vadd.f32 %v417, %v482
  %v515 = vadd.f32 %v418, %v483
  %v516 = vadd.f32 %v419, %v484
  %v517 = vadd.f32 %v420, %v485
  %v518 = vadd.f32 %v421, %v486
  %v519 = vadd.f32 %v422, %v487
  %v520 = vadd.f32 %v423, %v488
  %v521 = vadd.f32 %v424, %v489
  %v522 = vld [vmem:[%s99 + $0x1] sm:$0xff]
  %v523 = vld [vmem:[%s99 + $0x9] sm:$0xff]
  %v524 = vld [vmem:[%s99 + $0x19] sm:$0xff]
  %v525 = vld [vmem:[%s99 + $0x21] sm:$0xff]
  %v526 = vld [vmem:[%s99 + $0x31] sm:$0xff]
  %v527 = vld [vmem:[%s99 + $0x39] sm:$0xff]
  %v528 = vld [vmem:[%s99 + $0x49] sm:$0xff]
  %v529 = vld [vmem:[%s99 + $0x51] sm:$0xff]
  %v530 = vld [vmem:[%s99 + $0x61] sm:$0xff]
  %v531 = vld [vmem:[%s99 + $0x69] sm:$0xff]
  %v532 = vld [vmem:[%s99 + $0x79] sm:$0xff]
  %v533 = vld [vmem:[%s99 + $0x81] sm:$0xff]
  %v534 = vld [vmem:[%s99 + $0x91] sm:$0xff]
  %v535 = vld [vmem:[%s99 + $0x99] sm:$0xff]
  %v536 = vld [vmem:[%s99 + $0xa9] sm:$0xff]
  %v537 = vld [vmem:[%s99 + $0xb1] sm:$0xff]
  %v538 = vld [vmem:[%s99 + $0xc1] sm:$0xff]
  %v539 = vld [vmem:[%s99 + $0xc9] sm:$0xff]
  %v540 = vld [vmem:[%s99 + $0xd9] sm:$0xff]
  %v541 = vld [vmem:[%s99 + $0xe1] sm:$0xff]
  %v542 = vld [vmem:[%s99 + $0xf1] sm:$0xff]
  %v543 = vld [vmem:[%s99 + $0xf9] sm:$0xff]
  %v544 = vld [vmem:[%s99 + $0x109] sm:$0xff]
  %v545 = vld [vmem:[%s99 + $0x111] sm:$0xff]
  %v546 = vld [vmem:[%s99 + $0x121] sm:$0xff]
  %v547 = vld [vmem:[%s99 + $0x129] sm:$0xff]
  %v548 = vld [vmem:[%s99 + $0x139] sm:$0xff]
  %v549 = vld [vmem:[%s99 + $0x141] sm:$0xff]
  %v550 = vld [vmem:[%s99 + $0x151] sm:$0xff]
  %v551 = vld [vmem:[%s99 + $0x159] sm:$0xff]
  %v552 = vld [vmem:[%s99 + $0x169] sm:$0xff]
  %v553 = vld [vmem:[%s99 + $0x171] sm:$0xff]
  %v554 = vperm.slane %v132, 4
  %v555 = vmul.f32 %v554, %v522
  %v556 = vmul.f32 %v554, %v523
  %v557 = vmul.f32 %v554, %v524
  %v558 = vmul.f32 %v554, %v525
  %v559 = vmul.f32 %v554, %v526
  %v560 = vmul.f32 %v554, %v527
  %v561 = vmul.f32 %v554, %v528
  %v562 = vmul.f32 %v554, %v529
  %v563 = vmul.f32 %v554, %v530
  %v564 = vmul.f32 %v554, %v531
  %v565 = vmul.f32 %v554, %v532
  %v566 = vmul.f32 %v554, %v533
  %v567 = vmul.f32 %v554, %v534
  %v568 = vmul.f32 %v554, %v535
  %v569 = vmul.f32 %v554, %v536
  %v570 = vmul.f32 %v554, %v537
  %v571 = vmul.f32 %v554, %v538
  %v572 = vmul.f32 %v554, %v539
  %v573 = vmul.f32 %v554, %v540
  %v574 = vmul.f32 %v554, %v541
  %v575 = vmul.f32 %v554, %v542
  %v576 = vmul.f32 %v554, %v543
  %v577 = vmul.f32 %v554, %v544
  %v578 = vmul.f32 %v554, %v545
  %v579 = vmul.f32 %v554, %v546
  %v580 = vmul.f32 %v554, %v547
  %v581 = vmul.f32 %v554, %v548
  %v582 = vmul.f32 %v554, %v549
  %v583 = vmul.f32 %v554, %v550
  %v584 = vmul.f32 %v554, %v551
  %v585 = vmul.f32 %v554, %v552
  %v586 = vmul.f32 %v554, %v553
  %v587 = vadd.f32 %v490, %v555
  %v588 = vadd.f32 %v491, %v556
  %v589 = vadd.f32 %v492, %v557
  %v590 = vadd.f32 %v493, %v558
  %v591 = vadd.f32 %v494, %v559
  %v592 = vadd.f32 %v495, %v560
  %v593 = vadd.f32 %v496, %v561
  %v594 = vadd.f32 %v497, %v562
  %v595 = vadd.f32 %v498, %v563
  %v596 = vadd.f32 %v499, %v564
  %v597 = vadd.f32 %v500, %v565
  %v598 = vadd.f32 %v501, %v566
  %v599 = vadd.f32 %v502, %v567
  %v600 = vadd.f32 %v503, %v568
  %v601 = vadd.f32 %v504, %v569
  %v602 = vadd.f32 %v505, %v570
  %v603 = vadd.f32 %v506, %v571
  %v604 = vadd.f32 %v507, %v572
  %v605 = vadd.f32 %v508, %v573
  %v606 = vadd.f32 %v509, %v574
  %v607 = vadd.f32 %v510, %v575
  %v608 = vadd.f32 %v511, %v576
  %v609 = vadd.f32 %v512, %v577
  %v610 = vadd.f32 %v513, %v578
  %v611 = vadd.f32 %v514, %v579
  %v612 = vadd.f32 %v515, %v580
  %v613 = vadd.f32 %v516, %v581
  %v614 = vadd.f32 %v517, %v582
  %v615 = vadd.f32 %v518, %v583
  %v616 = vadd.f32 %v519, %v584
  %v617 = vadd.f32 %v520, %v585
  %v618 = vadd.f32 %v521, %v586
  %v619 = vld [vmem:[%s99 + $0x2] sm:$0xff]
  %v620 = vld [vmem:[%s99 + $0xa] sm:$0xff]
  %v621 = vld [vmem:[%s99 + $0x1a] sm:$0xff]
  %v622 = vld [vmem:[%s99 + $0x22] sm:$0xff]
  %v623 = vld [vmem:[%s99 + $0x32] sm:$0xff]
  %v624 = vld [vmem:[%s99 + $0x3a] sm:$0xff]
  %v625 = vld [vmem:[%s99 + $0x4a] sm:$0xff]
  %v626 = vld [vmem:[%s99 + $0x52] sm:$0xff]
  %v627 = vld [vmem:[%s99 + $0x62] sm:$0xff]
  %v628 = vld [vmem:[%s99 + $0x6a] sm:$0xff]
  %v629 = vld [vmem:[%s99 + $0x7a] sm:$0xff]
  %v630 = vld [vmem:[%s99 + $0x82] sm:$0xff]
  %v631 = vld [vmem:[%s99 + $0x92] sm:$0xff]
  %v632 = vld [vmem:[%s99 + $0x9a] sm:$0xff]
  %v633 = vld [vmem:[%s99 + $0xaa] sm:$0xff]
  %v634 = vld [vmem:[%s99 + $0xb2] sm:$0xff]
  %v635 = vld [vmem:[%s99 + $0xc2] sm:$0xff]
  %v636 = vld [vmem:[%s99 + $0xca] sm:$0xff]
  %v637 = vld [vmem:[%s99 + $0xda] sm:$0xff]
  %v638 = vld [vmem:[%s99 + $0xe2] sm:$0xff]
  %v639 = vld [vmem:[%s99 + $0xf2] sm:$0xff]
  %v640 = vld [vmem:[%s99 + $0xfa] sm:$0xff]
  %v641 = vld [vmem:[%s99 + $0x10a] sm:$0xff]
  %v642 = vld [vmem:[%s99 + $0x112] sm:$0xff]
  %v643 = vld [vmem:[%s99 + $0x122] sm:$0xff]
  %v644 = vld [vmem:[%s99 + $0x12a] sm:$0xff]
  %v645 = vld [vmem:[%s99 + $0x13a] sm:$0xff]
  %v646 = vld [vmem:[%s99 + $0x142] sm:$0xff]
  %v647 = vld [vmem:[%s99 + $0x152] sm:$0xff]
  %v648 = vld [vmem:[%s99 + $0x15a] sm:$0xff]
  %v649 = vld [vmem:[%s99 + $0x16a] sm:$0xff]
  %v650 = vld [vmem:[%s99 + $0x172] sm:$0xff]
  %v651 = vperm.slane %v132, 5
  %v652 = vmul.f32 %v651, %v619
  %v653 = vmul.f32 %v651, %v620
  %v654 = vmul.f32 %v651, %v621
  %v655 = vmul.f32 %v651, %v622
  %v656 = vmul.f32 %v651, %v623
  %v657 = vmul.f32 %v651, %v624
  %v658 = vmul.f32 %v651, %v625
  %v659 = vmul.f32 %v651, %v626
  %v660 = vmul.f32 %v651, %v627
  %v661 = vmul.f32 %v651, %v628
  %v662 = vmul.f32 %v651, %v629
  %v663 = vmul.f32 %v651, %v630
  %v664 = vmul.f32 %v651, %v631
  %v665 = vmul.f32 %v651, %v632
  %v666 = vmul.f32 %v651, %v633
  %v667 = vmul.f32 %v651, %v634
  %v668 = vmul.f32 %v651, %v635
  %v669 = vmul.f32 %v651, %v636
  %v670 = vmul.f32 %v651, %v637
  %v671 = vmul.f32 %v651, %v638
  %v672 = vmul.f32 %v651, %v639
  %v673 = vmul.f32 %v651, %v640
  %v674 = vmul.f32 %v651, %v641
  %v675 = vmul.f32 %v651, %v642
  %v676 = vmul.f32 %v651, %v643
  %v677 = vmul.f32 %v651, %v644
  %v678 = vmul.f32 %v651, %v645
  %v679 = vmul.f32 %v651, %v646
  %v680 = vmul.f32 %v651, %v647
  %v681 = vmul.f32 %v651, %v648
  %v682 = vmul.f32 %v651, %v649
  %v683 = vmul.f32 %v651, %v650
  %v684 = vadd.f32 %v587, %v652
  %v685 = vadd.f32 %v588, %v653
  %v686 = vadd.f32 %v589, %v654
  %v687 = vadd.f32 %v590, %v655
  %v688 = vadd.f32 %v591, %v656
  %v689 = vadd.f32 %v592, %v657
  %v690 = vadd.f32 %v593, %v658
  %v691 = vadd.f32 %v594, %v659
  %v692 = vadd.f32 %v595, %v660
  %v693 = vadd.f32 %v596, %v661
  %v694 = vadd.f32 %v597, %v662
  %v695 = vadd.f32 %v598, %v663
  %v696 = vadd.f32 %v599, %v664
  %v697 = vadd.f32 %v600, %v665
  %v698 = vadd.f32 %v601, %v666
  %v699 = vadd.f32 %v602, %v667
  %v700 = vadd.f32 %v603, %v668
  %v701 = vadd.f32 %v604, %v669
  %v702 = vadd.f32 %v605, %v670
  %v703 = vadd.f32 %v606, %v671
  %v704 = vadd.f32 %v607, %v672
  %v705 = vadd.f32 %v608, %v673
  %v706 = vadd.f32 %v609, %v674
  %v707 = vadd.f32 %v610, %v675
  %v708 = vadd.f32 %v611, %v676
  %v709 = vadd.f32 %v612, %v677
  %v710 = vadd.f32 %v613, %v678
  %v711 = vadd.f32 %v614, %v679
  %v712 = vadd.f32 %v615, %v680
  %v713 = vadd.f32 %v616, %v681
  %v714 = vadd.f32 %v617, %v682
  %v715 = vadd.f32 %v618, %v683
  %s716 = scalar_lea.vmem [#allocation2], 48
  %v717 = vld [vmem:[%s716] sm:$0xff]
  %v718 = vld [vmem:[%s716 + $0x8] sm:$0xff]
  %v719 = vld [vmem:[%s716 + $0x18] sm:$0xff]
  %v720 = vld [vmem:[%s716 + $0x20] sm:$0xff]
  %v721 = vld [vmem:[%s716 + $0x30] sm:$0xff]
  %v722 = vld [vmem:[%s716 + $0x38] sm:$0xff]
  %v723 = vld [vmem:[%s716 + $0x48] sm:$0xff]
  %v724 = vld [vmem:[%s716 + $0x50] sm:$0xff]
  %v725 = vld [vmem:[%s716 + $0x60] sm:$0xff]
  %v726 = vld [vmem:[%s716 + $0x68] sm:$0xff]
  %v727 = vld [vmem:[%s716 + $0x78] sm:$0xff]
  %v728 = vld [vmem:[%s716 + $0x80] sm:$0xff]
  %v729 = vld [vmem:[%s716 + $0x90] sm:$0xff]
  %v730 = vld [vmem:[%s716 + $0x98] sm:$0xff]
  %v731 = vld [vmem:[%s716 + $0xa8] sm:$0xff]
  %v732 = vld [vmem:[%s716 + $0xb0] sm:$0xff]
  %v733 = vld [vmem:[%s716 + $0xc0] sm:$0xff]
  %v734 = vld [vmem:[%s716 + $0xc8] sm:$0xff]
  %v735 = vld [vmem:[%s716 + $0xd8] sm:$0xff]
  %v736 = vld [vmem:[%s716 + $0xe0] sm:$0xff]
  %v737 = vld [vmem:[%s716 + $0xf0] sm:$0xff]
  %v738 = vld [vmem:[%s716 + $0xf8] sm:$0xff]
  %v739 = vld [vmem:[%s716 + $0x108] sm:$0xff]
  %v740 = vld [vmem:[%s716 + $0x110] sm:$0xff]
  %v741 = vld [vmem:[%s716 + $0x120] sm:$0xff]
  %v742 = vld [vmem:[%s716 + $0x128] sm:$0xff]
  %v743 = vld [vmem:[%s716 + $0x138] sm:$0xff]
  %v744 = vld [vmem:[%s716 + $0x140] sm:$0xff]
  %v745 = vld [vmem:[%s716 + $0x150] sm:$0xff]
  %v746 = vld [vmem:[%s716 + $0x158] sm:$0xff]
  %v747 = vld [vmem:[%s716 + $0x168] sm:$0xff]
  %v748 = vld [vmem:[%s716 + $0x170] sm:$0xff]
  %v749 = vperm.slane %v132, 6
  %v750 = vmul.f32 %v749, %v717
  %v751 = vmul.f32 %v749, %v718
  %v752 = vmul.f32 %v749, %v719
  %v753 = vmul.f32 %v749, %v720
  %v754 = vmul.f32 %v749, %v721
  %v755 = vmul.f32 %v749, %v722
  %v756 = vmul.f32 %v749, %v723
  %v757 = vmul.f32 %v749, %v724
  %v758 = vmul.f32 %v749, %v725
  %v759 = vmul.f32 %v749, %v726
  %v760 = vmul.f32 %v749, %v727
  %v761 = vmul.f32 %v749, %v728
  %v762 = vmul.f32 %v749, %v729
  %v763 = vmul.f32 %v749, %v730
  %v764 = vmul.f32 %v749, %v731
  %v765 = vmul.f32 %v749, %v732
  %v766 = vmul.f32 %v749, %v733
  %v767 = vmul.f32 %v749, %v734
  %v768 = vmul.f32 %v749, %v735
  %v769 = vmul.f32 %v749, %v736
  %v770 = vmul.f32 %v749, %v737
  %v771 = vmul.f32 %v749, %v738
  %v772 = vmul.f32 %v749, %v739
  %v773 = vmul.f32 %v749, %v740
  %v774 = vmul.f32 %v749, %v741
  %v775 = vmul.f32 %v749, %v742
  %v776 = vmul.f32 %v749, %v743
  %v777 = vmul.f32 %v749, %v744
  %v778 = vmul.f32 %v749, %v745
  %v779 = vmul.f32 %v749, %v746
  %v780 = vmul.f32 %v749, %v747
  %v781 = vmul.f32 %v749, %v748
  %v782 = vadd.f32 %v684, %v750
  %v783 = vadd.f32 %v685, %v751
  %v784 = vadd.f32 %v686, %v752
  %v785 = vadd.f32 %v687, %v753
  %v786 = vadd.f32 %v688, %v754
  %v787 = vadd.f32 %v689, %v755
  %v788 = vadd.f32 %v690, %v756
  %v789 = vadd.f32 %v691, %v757
  %v790 = vadd.f32 %v692, %v758
  %v791 = vadd.f32 %v693, %v759
  %v792 = vadd.f32 %v694, %v760
  %v793 = vadd.f32 %v695, %v761
  %v794 = vadd.f32 %v696, %v762
  %v795 = vadd.f32 %v697, %v763
  %v796 = vadd.f32 %v698, %v764
  %v797 = vadd.f32 %v699, %v765
  %v798 = vadd.f32 %v700, %v766
  %v799 = vadd.f32 %v701, %v767
  %v800 = vadd.f32 %v702, %v768
  %v801 = vadd.f32 %v703, %v769
  %v802 = vadd.f32 %v704, %v770
  %v803 = vadd.f32 %v705, %v771
  %v804 = vadd.f32 %v706, %v772
  %v805 = vadd.f32 %v707, %v773
  %v806 = vadd.f32 %v708, %v774
  %v807 = vadd.f32 %v709, %v775
  %v808 = vadd.f32 %v710, %v776
  %v809 = vadd.f32 %v711, %v777
  %v810 = vadd.f32 %v712, %v778
  %v811 = vadd.f32 %v713, %v779
  %v812 = vadd.f32 %v714, %v780
  %v813 = vadd.f32 %v715, %v781
  %v814 = vld [vmem:[%s716 + $0x1] sm:$0xff]
  %v815 = vld [vmem:[%s716 + $0x9] sm:$0xff]
  %v816 = vld [vmem:[%s716 + $0x19] sm:$0xff]
  %v817 = vld [vmem:[%s716 + $0x21] sm:$0xff]
  %v818 = vld [vmem:[%s716 + $0x31] sm:$0xff]
  %v819 = vld [vmem:[%s716 + $0x39] sm:$0xff]
  %v820 = vld [vmem:[%s716 + $0x49] sm:$0xff]
  %v821 = vld [vmem:[%s716 + $0x51] sm:$0xff]
  %v822 = vld [vmem:[%s716 + $0x61] sm:$0xff]
  %v823 = vld [vmem:[%s716 + $0x69] sm:$0xff]
  %v824 = vld [vmem:[%s716 + $0x79] sm:$0xff]
  %v825 = vld [vmem:[%s716 + $0x81] sm:$0xff]
  %v826 = vld [vmem:[%s716 + $0x91] sm:$0xff]
  %v827 = vld [vmem:[%s716 + $0x99] sm:$0xff]
  %v828 = vld [vmem:[%s716 + $0xa9] sm:$0xff]
  %v829 = vld [vmem:[%s716 + $0xb1] sm:$0xff]
  %v830 = vld [vmem:[%s716 + $0xc1] sm:$0xff]
  %v831 = vld [vmem:[%s716 + $0xc9] sm:$0xff]
  %v832 = vld [vmem:[%s716 + $0xd9] sm:$0xff]
  %v833 = vld [vmem:[%s716 + $0xe1] sm:$0xff]
  %v834 = vld [vmem:[%s716 + $0xf1] sm:$0xff]
  %v835 = vld [vmem:[%s716 + $0xf9] sm:$0xff]
  %v836 = vld [vmem:[%s716 + $0x109] sm:$0xff]
  %v837 = vld [vmem:[%s716 + $0x111] sm:$0xff]
  %v838 = vld [vmem:[%s716 + $0x121] sm:$0xff]
  %v839 = vld [vmem:[%s716 + $0x129] sm:$0xff]
  %v840 = vld [vmem:[%s716 + $0x139] sm:$0xff]
  %v841 = vld [vmem:[%s716 + $0x141] sm:$0xff]
  %v842 = vld [vmem:[%s716 + $0x151] sm:$0xff]
  %v843 = vld [vmem:[%s716 + $0x159] sm:$0xff]
  %v844 = vld [vmem:[%s716 + $0x169] sm:$0xff]
  %v845 = vld [vmem:[%s716 + $0x171] sm:$0xff]
  %v846 = vperm.slane %v132, 7
  %v847 = vmul.f32 %v846, %v814
  %v848 = vmul.f32 %v846, %v815
  %v849 = vmul.f32 %v846, %v816
  %v850 = vmul.f32 %v846, %v817
  %v851 = vmul.f32 %v846, %v818
  %v852 = vmul.f32 %v846, %v819
  %v853 = vmul.f32 %v846, %v820
  %v854 = vmul.f32 %v846, %v821
  %v855 = vmul.f32 %v846, %v822
  %v856 = vmul.f32 %v846, %v823
  %v857 = vmul.f32 %v846, %v824
  %v858 = vmul.f32 %v846, %v825
  %v859 = vmul.f32 %v846, %v826
  %v860 = vmul.f32 %v846, %v827
  %v861 = vmul.f32 %v846, %v828
  %v862 = vmul.f32 %v846, %v829
  %v863 = vmul.f32 %v846, %v830
  %v864 = vmul.f32 %v846, %v831
  %v865 = vmul.f32 %v846, %v832
  %v866 = vmul.f32 %v846, %v833
  %v867 = vmul.f32 %v846, %v834
  %v868 = vmul.f32 %v846, %v835
  %v869 = vmul.f32 %v846, %v836
  %v870 = vmul.f32 %v846, %v837
  %v871 = vmul.f32 %v846, %v838
  %v872 = vmul.f32 %v846, %v839
  %v873 = vmul.f32 %v846, %v840
  %v874 = vmul.f32 %v846, %v841
  %v875 = vmul.f32 %v846, %v842
  %v876 = vmul.f32 %v846, %v843
  %v877 = vmul.f32 %v846, %v844
  %v878 = vmul.f32 %v846, %v845
  %v879 = vadd.f32 %v782, %v847
  %v880 = vadd.f32 %v783, %v848
  %v881 = vadd.f32 %v784, %v849
  %v882 = vadd.f32 %v785, %v850
  %v883 = vadd.f32 %v786, %v851
  %v884 = vadd.f32 %v787, %v852
  %v885 = vadd.f32 %v788, %v853
  %v886 = vadd.f32 %v789, %v854
  %v887 = vadd.f32 %v790, %v855
  %v888 = vadd.f32 %v791, %v856
  %v889 = vadd.f32 %v792, %v857
  %v890 = vadd.f32 %v793, %v858
  %v891 = vadd.f32 %v794, %v859
  %v892 = vadd.f32 %v795, %v860
  %v893 = vadd.f32 %v796, %v861
  %v894 = vadd.f32 %v797, %v862
  %v895 = vadd.f32 %v798, %v863
  %v896 = vadd.f32 %v799, %v864
  %v897 = vadd.f32 %v800, %v865
  %v898 = vadd.f32 %v801, %v866
  %v899 = vadd.f32 %v802, %v867
  %v900 = vadd.f32 %v803, %v868
  %v901 = vadd.f32 %v804, %v869
  %v902 = vadd.f32 %v805, %v870
  %v903 = vadd.f32 %v806, %v871
  %v904 = vadd.f32 %v807, %v872
  %v905 = vadd.f32 %v808, %v873
  %v906 = vadd.f32 %v809, %v874
  %v907 = vadd.f32 %v810, %v875
  %v908 = vadd.f32 %v811, %v876
  %v909 = vadd.f32 %v812, %v877
  %v910 = vadd.f32 %v813, %v878
  %v911 = vld [vmem:[%s716 + $0x2] sm:$0xff]
  %v912 = vld [vmem:[%s716 + $0xa] sm:$0xff]
  %v913 = vld [vmem:[%s716 + $0x1a] sm:$0xff]
  %v914 = vld [vmem:[%s716 + $0x22] sm:$0xff]
  %v915 = vld [vmem:[%s716 + $0x32] sm:$0xff]
  %v916 = vld [vmem:[%s716 + $0x3a] sm:$0xff]
  %v917 = vld [vmem:[%s716 + $0x4a] sm:$0xff]
  %v918 = vld [vmem:[%s716 + $0x52] sm:$0xff]
  %v919 = vld [vmem:[%s716 + $0x62] sm:$0xff]
  %v920 = vld [vmem:[%s716 + $0x6a] sm:$0xff]
  %v921 = vld [vmem:[%s716 + $0x7a] sm:$0xff]
  %v922 = vld [vmem:[%s716 + $0x82] sm:$0xff]
  %v923 = vld [vmem:[%s716 + $0x92] sm:$0xff]
  %v924 = vld [vmem:[%s716 + $0x9a] sm:$0xff]
  %v925 = vld [vmem:[%s716 + $0xaa] sm:$0xff]
  %v926 = vld [vmem:[%s716 + $0xb2] sm:$0xff]
  %v927 = vld [vmem:[%s716 + $0xc2] sm:$0xff]
  %v928 = vld [vmem:[%s716 + $0xca] sm:$0xff]
  %v929 = vld [vmem:[%s716 + $0xda] sm:$0xff]
  %v930 = vld [vmem:[%s716 + $0xe2] sm:$0xff]
  %v931 = vld [vmem:[%s716 + $0xf2] sm:$0xff]
  %v932 = vld [vmem:[%s716 + $0xfa] sm:$0xff]
  %v933 = vld [vmem:[%s716 + $0x10a] sm:$0xff]
  %v934 = vld [vmem:[%s716 + $0x112] sm:$0xff]
  %v935 = vld [vmem:[%s716 + $0x122] sm:$0xff]
  %v936 = vld [vmem:[%s716 + $0x12a] sm:$0xff]
  %v937 = vld [vmem:[%s716 + $0x13a] sm:$0xff]
  %v938 = vld [vmem:[%s716 + $0x142] sm:$0xff]
  %v939 = vld [vmem:[%s716 + $0x152] sm:$0xff]
  %v940 = vld [vmem:[%s716 + $0x15a] sm:$0xff]
  %v941 = vld [vmem:[%s716 + $0x16a] sm:$0xff]
  %v942 = vld [vmem:[%s716 + $0x172] sm:$0xff]
  %v943 = vperm.slane %v133, 0
  %v944 = vmul.f32 %v943, %v911
  %v945 = vmul.f32 %v943, %v912
  %v946 = vmul.f32 %v943, %v913
  %v947 = vmul.f32 %v943, %v914
  %v948 = vmul.f32 %v943, %v915
  %v949 = vmul.f32 %v943, %v916
  %v950 = vmul.f32 %v943, %v917
  %v951 = vmul.f32 %v943, %v918
  %v952 = vmul.f32 %v943, %v919
  %v953 = vmul.f32 %v943, %v920
  %v954 = vmul.f32 %v943, %v921
  %v955 = vmul.f32 %v943, %v922
  %v956 = vmul.f32 %v943, %v923
  %v957 = vmul.f32 %v943, %v924
  %v958 = vmul.f32 %v943, %v925
  %v959 = vmul.f32 %v943, %v926
  %v960 = vmul.f32 %v943, %v927
  %v961 = vmul.f32 %v943, %v928
  %v962 = vmul.f32 %v943, %v929
  %v963 = vmul.f32 %v943, %v930
  %v964 = vmul.f32 %v943, %v931
  %v965 = vmul.f32 %v943, %v932
  %v966 = vmul.f32 %v943, %v933
  %v967 = vmul.f32 %v943, %v934
  %v968 = vmul.f32 %v943, %v935
  %v969 = vmul.f32 %v943, %v936
  %v970 = vmul.f32 %v943, %v937
  %v971 = vmul.f32 %v943, %v938
  %v972 = vmul.f32 %v943, %v939
  %v973 = vmul.f32 %v943, %v940
  %v974 = vmul.f32 %v943, %v941
  %v975 = vmul.f32 %v943, %v942
  %v976 = vadd.f32 %v879, %v944
  %v977 = vadd.f32 %v880, %v945
  %v978 = vadd.f32 %v881, %v946
  %v979 = vadd.f32 %v882, %v947
  %v980 = vadd.f32 %v883, %v948
  %v981 = vadd.f32 %v884, %v949
  %v982 = vadd.f32 %v885, %v950
  %v983 = vadd.f32 %v886, %v951
  %v984 = vadd.f32 %v887, %v952
  %v985 = vadd.f32 %v888, %v953
  %v986 = vadd.f32 %v889, %v954
  %v987 = vadd.f32 %v890, %v955
  %v988 = vadd.f32 %v891, %v956
  %v989 = vadd.f32 %v892, %v957
  %v990 = vadd.f32 %v893, %v958
  %v991 = vadd.f32 %v894, %v959
  %v992 = vadd.f32 %v895, %v960
  %v993 = vadd.f32 %v896, %v961
  %v994 = vadd.f32 %v897, %v962
  %v995 = vadd.f32 %v898, %v963
  %v996 = vadd.f32 %v899, %v964
  %v997 = vadd.f32 %v900, %v965
  %v998 = vadd.f32 %v901, %v966
  %v999 = vadd.f32 %v902, %v967
  %v1000 = vadd.f32 %v903, %v968
  %v1001 = vadd.f32 %v904, %v969
  %v1002 = vadd.f32 %v905, %v970
  %v1003 = vadd.f32 %v906, %v971
  %v1004 = vadd.f32 %v907, %v972
  %v1005 = vadd.f32 %v908, %v973
  %v1006 = vadd.f32 %v909, %v974
  %v1007 = vadd.f32 %v910, %v975
  %1008 = vst.msk [vmem:[%s2] sm:$0xff] %vm11, %v976
  %1009 = vst.msk [vmem:[%s2 + $0x8] sm:$0xff] %vm11, %v977
  %1010 = vst.msk [vmem:[%s2 + $0x10] sm:$0xff] %vm11, %v978
  %1011 = vst.msk [vmem:[%s2 + $0x18] sm:$0xff] %vm11, %v979
  %1012 = vst.msk [vmem:[%s2 + $0x20] sm:$0xff] %vm11, %v980
  %1013 = vst.msk [vmem:[%s2 + $0x28] sm:$0xff] %vm11, %v981
  %1014 = vst.msk [vmem:[%s2 + $0x30] sm:$0xff] %vm11, %v982
  %1015 = vst.msk [vmem:[%s2 + $0x38] sm:$0xff] %vm11, %v983
  %1016 = vst.msk [vmem:[%s2 + $0x40] sm:$0xff] %vm11, %v984
  %1017 = vst.msk [vmem:[%s2 + $0x48] sm:$0xff] %vm11, %v985
  %1018 = vst.msk [vmem:[%s2 + $0x50] sm:$0xff] %vm11, %v986
  %1019 = vst.msk [vmem:[%s2 + $0x58] sm:$0xff] %vm11, %v987
  %1020 = vst.msk [vmem:[%s2 + $0x60] sm:$0xff] %vm11, %v988
  %1021 = vst.msk [vmem:[%s2 + $0x68] sm:$0xff] %vm11, %v989
  %1022 = vst.msk [vmem:[%s2 + $0x70] sm:$0xff] %vm11, %v990
  %1023 = vst.msk [vmem:[%s2 + $0x78] sm:$0xff] %vm11, %v991
  %1024 = vst.msk [vmem:[%s2 + $0x80] sm:$0xff] %vm11, %v992
  %1025 = vst.msk [vmem:[%s2 + $0x88] sm:$0xff] %vm11, %v993
  %1026 = vst.msk [vmem:[%s2 + $0x90] sm:$0xff] %vm11, %v994
  %1027 = vst.msk [vmem:[%s2 + $0x98] sm:$0xff] %vm11, %v995
  %1028 = vst.msk [vmem:[%s2 + $0xa0] sm:$0xff] %vm11, %v996
  %1029 = vst.msk [vmem:[%s2 + $0xa8] sm:$0xff] %vm11, %v997
  %1030 = vst.msk [vmem:[%s2 + $0xb0] sm:$0xff] %vm11, %v998
  %1031 = vst.msk [vmem:[%s2 + $0xb8] sm:$0xff] %vm11, %v999
  %1032 = vst.msk [vmem:[%s2 + $0xc0] sm:$0xff] %vm11, %v1000
  %1033 = vst.msk [vmem:[%s2 + $0xc8] sm:$0xff] %vm11, %v1001
  %1034 = vst.msk [vmem:[%s2 + $0xd0] sm:$0xff] %vm11, %v1002
  %1035 = vst.msk [vmem:[%s2 + $0xd8] sm:$0xff] %vm11, %v1003
  %1036 = vst.msk [vmem:[%s2 + $0xe0] sm:$0xff] %vm11, %v1004
  %1037 = vst.msk [vmem:[%s2 + $0xe8] sm:$0xff] %vm11, %v1005
  %1038 = vst.msk [vmem:[%s2 + $0xf0] sm:$0xff] %vm11, %v1006
  %1039 = vst.msk [vmem:[%s2 + $0xf8] sm:$0xff] %vm11, %v1007
  // Predicated region
  $region10: #{tpu_custom_call.1} parent=0 // pred_check
    _
  $region11: #{tpu_custom_call.1} parent=0 // pred_check_branch
    %1041 = sbr.rel (0) target = $region13
  $region12: #{tpu_custom_call.1} parent=0 // pred_region
    _
  $region13: #{tpu_custom_call.1} parent=0 // pred_fallthru
    _
  // Predicated region
  $region14: #{tpu_custom_call.1} parent=0 // pred_check
    _
  $region15: #{tpu_custom_call.1} parent=0 // pred_check_branch
    %1043 = sbr.rel (0) target = $region17
  $region16: #{tpu_custom_call.1} parent=0 // pred_region
    _
  $region17: #{tpu_custom_call.1} parent=0 // pred_fallthru
    _

</llo_original>
